<compile_context>
chip_gen: v5e
topology: v5e:2x2
jax: 0.10.0
libtpu: 0.0.40
codegen_flags: <defaults>
</compile_context>

<pallas_src>
import functools

import jax
import jax.numpy as jnp
from jax.experimental import pallas as pl
from jax.experimental.pallas import tpu as pltpu


def _osg_decoder_kernel(x_ref, w1_ref, b1_ref, w2_ref, b2_ref, out_ref,
                        *, n_planes, compute_dtype, act_dtype):
    # x_ref: (P, tile_m, C) features (batch dim squeezed away by BlockSpec).
    # Plane mean is folded into w1 (pre-scaled by 1/P in the wrapper), so FC1 is
    # accumulated directly over the P planes — no separate mean pass.
    w1 = w1_ref[...]
    h = jnp.dot(x_ref[0].astype(compute_dtype), w1,
                preferred_element_type=jnp.float32)
    for p in range(1, n_planes):
        h = h + jnp.dot(x_ref[p].astype(compute_dtype), w1,
                        preferred_element_type=jnp.float32)
    h = h + b1_ref[...]                                           # f32 bias add

    # Softplus on the EUP. bf16 on v6e/v7x (halves push count), f32 on v5e.
    # jax.nn.softplus differs from torch F.softplus(threshold=20) for x>20 by <1e-9.
    h = jax.nn.softplus(h.astype(act_dtype))

    # FC2 (hidden -> 1 + decoder_output_dim), f32 accumulation.
    o = jnp.dot(h.astype(compute_dtype), w2_ref[...],
                preferred_element_type=jnp.float32)
    o = o + b2_ref[...]                                           # (tile_m, 1+D)

    # Fused output: lane 0 = raw sigma, lanes 1.. = sigmoid-mapped rgb.
    lane = jax.lax.broadcasted_iota(jnp.int32, o.shape, dimension=1)
    rgb = jax.nn.sigmoid(o.astype(act_dtype)).astype(jnp.float32)
    rgb = rgb * (1.0 + 2.0 * 0.001) - 0.001
    out_ref[...] = jnp.where(lane == 0, o, rgb).astype(out_ref.dtype)


def _device_kind():
    try:
        return jax.devices()[0].device_kind.lower()
    except Exception:
        return ""


def osg_decoder_forward(sampled_features, ray_directions, params, *,
                        tile_m=4096, precision="bf16"):
    """sampled_features: (N, P, M, C); ray_directions unused (as in PyTorch).

    precision="bf16": bf16 feature streaming + bf16 MXU operands (+ bf16
    transcendentals on v6e/v7x), f32 accumulation.  precision="f32": exact path.
    """
    del ray_directions  # not used by the reference forward
    N, P, M, C = sampled_features.shape
    w1_eff, b1_eff, w2_eff, b2_eff = params  # pre-scaled effective weights/biases
    H = w1_eff.shape[1]
    O = w2_eff.shape[1]

    kind = _device_kind()
    is_v5 = "v5" in kind
    is_v7 = ("v7" in kind) or ("tpu7" in kind)

    if precision == "bf16":
        compute_dtype = jnp.bfloat16
        # v5e has no bf16 EUP/VPU path: keep transcendentals in f32 there.
        act_dtype = jnp.float32 if is_v5 else jnp.bfloat16
    else:
        compute_dtype = jnp.float32
        act_dtype = jnp.float32

    # bf16 feature streaming halves the dominant HBM read; weights cast once.
    feat = sampled_features.astype(compute_dtype)
    w1 = (w1_eff / float(P)).astype(compute_dtype)   # fold plane mean into FC1
    w2 = w2_eff.astype(compute_dtype)
    b1 = b1_eff.astype(jnp.float32)
    b2 = b2_eff.astype(jnp.float32)

    # Tile sizing: big row tiles amortize per-step overhead; keep the second-minor
    # block dim a multiple of 8 (or the full extent) for the (8,128) tiling rule.
    tile_m_req = min(tile_m, 4096) if is_v7 else tile_m   # 64 MiB physical VMEM on v7x
    tile_m_eff = min(tile_m_req, M)
    if tile_m_eff < M:
        tile_m_eff = max(8, (tile_m_eff // 8) * 8)

    # v7x has 2 TensorCores: make sure the ("parallel","parallel") grid has >= 2
    # steps so both cores get work.
    if is_v7 and N * pl.cdiv(M, tile_m_eff) < 2 and M >= 16:
        half = -(-M // 2)
        tile_m_eff = max(8, ((half + 7) // 8) * 8)

    grid = (N, pl.cdiv(M, tile_m_eff))

    # Lane-padded footprint is small (<~20 MiB at tile_m=4096 with bf16 features);
    # raise the scoped VMEM limit with headroom, generation-aware.
    vmem_limit = (48 << 20) if is_v7 else (96 << 20)

    kernel = functools.partial(_osg_decoder_kernel, n_planes=P,
                               compute_dtype=compute_dtype, act_dtype=act_dtype)

    out = pl.pallas_call(
        kernel,
        out_shape=jax.ShapeDtypeStruct((N, M, O), jnp.float32),
        grid_spec=pltpu.PrefetchScalarGridSpec(
            num_scalar_prefetch=0,
            grid=grid,
            in_specs=[
                # Consume the original (N, P, M, C) layout directly — no host transpose.
                pl.BlockSpec((pl.Squeezed(), P, tile_m_eff, C),
                             lambda n, i: (n, 0, i, 0)),
                pl.BlockSpec((C, H), lambda n, i: (0, 0)),
                pl.BlockSpec((1, H), lambda n, i: (0, 0)),
                pl.BlockSpec((H, O), lambda n, i: (0, 0)),
                pl.BlockSpec((1, O), lambda n, i: (0, 0)),
            ],
            out_specs=pl.BlockSpec((pl.Squeezed(), tile_m_eff, O),
                                   lambda n, i: (n, i, 0)),
        ),
        compiler_params=pltpu.CompilerParams(
            dimension_semantics=("parallel", "parallel"),
            vmem_limit_bytes=vmem_limit),
    )(feat, w1, b1, w2, b2)

    return {
        "rgb": out[..., 1:],
        "sigma": out[..., 0:1],
    }


def make_params(key, n_features, hidden_dim, decoder_output_dim, lr_multiplier):
    """Deterministic synthetic parameters matching FullyConnectedLayer semantics.

    FullyConnectedLayer stores weight ~ randn(out,in)/lr_mul and applies
    weight_gain = lr_mul/sqrt(in), bias_gain = lr_mul at forward time.
    We fold the gains into "effective" weights/biases here (plain-JAX glue).
    """
    k1, k2, k3, k4 = jax.random.split(key, 4)
    out2 = 1 + decoder_output_dim

    raw_w1 = jax.random.normal(k1, (hidden_dim, n_features), jnp.float32) / lr_multiplier
    raw_b1 = 0.01 * jax.random.normal(k2, (hidden_dim,), jnp.float32)
    raw_w2 = jax.random.normal(k3, (out2, hidden_dim), jnp.float32) / lr_multiplier
    raw_b2 = 0.01 * jax.random.normal(k4, (out2,), jnp.float32)

    w1_eff = (raw_w1 * (lr_multiplier / jnp.sqrt(n_features))).T          # (C, H)
    b1_eff = (raw_b1 * lr_multiplier).reshape(1, hidden_dim)              # (1, H)
    w2_eff = (raw_w2 * (lr_multiplier / jnp.sqrt(hidden_dim))).T          # (H, 1+D)
    b2_eff = (raw_b2 * lr_multiplier).reshape(1, out2)                    # (1, 1+D)
    return (w1_eff, b1_eff, w2_eff, b2_eff)


def reference_forward(sampled_features, params):
    """Pure-JAX f32 reference for correctness checking."""
    w1, b1, w2, b2 = params
    x = sampled_features.astype(jnp.float32).mean(axis=1)     # (N, M, C)
    N, M, C = x.shape
    x = x.reshape(N * M, C)
    h = jax.nn.softplus(x @ w1 + b1)
    o = h @ w2 + b2
    o = o.reshape(N, M, -1)
    rgb = jax.nn.sigmoid(o[..., 1:]) * (1 + 2 * 0.001) - 0.001
    sigma = o[..., 0:1]
    return {"rgb": rgb, "sigma": sigma}


if __name__ == "__main__":
    key = jax.random.PRNGKey(0)
    k_feat, k_dir, k_params = jax.random.split(key, 3)

    # Small shapes consistent with the module:
    N, n_planes, M, C = 2, 3, 64, 32          # batch, triplanes, rays*samples, features
    hidden_dim = 64
    decoder_output_dim = 3                    # -> net output = 1 + 3
    decoder_lr_mul = 1.0

    sampled_features = jax.random.normal(k_feat, (N, n_planes, M, C), jnp.float32)
    ray_directions = jax.random.normal(k_dir, (N, M, 3), jnp.float32)  # unused (as in PyTorch)

    params = make_params(k_params, C, hidden_dim, decoder_output_dim, decoder_lr_mul)
    ref = reference_forward(sampled_features, params)

    # 1) Exact f32 path: tight tolerance against the pure-JAX reference.
    out_f32 = osg_decoder_forward(sampled_features, ray_directions, params,
                                  precision="f32")
    jax.block_until_ready(out_f32)
    assert out_f32["rgb"].shape == (N, M, decoder_output_dim)
    assert out_f32["sigma"].shape == (N, M, 1)
    assert jnp.allclose(out_f32["rgb"], ref["rgb"], atol=1e-5, rtol=1e-5)
    assert jnp.allclose(out_f32["sigma"], ref["sigma"], atol=1e-5, rtol=1e-5)

    # 2) Fast path (bf16 streaming / MXU / EUP where supported): loose tolerance.
    out_fast = osg_decoder_forward(sampled_features, ray_directions, params)
    jax.block_until_ready(out_fast)
    assert jnp.allclose(out_fast["rgb"], ref["rgb"], atol=5e-2, rtol=5e-2)
    assert jnp.allclose(out_fast["sigma"], ref["sigma"], atol=5e-2, rtol=5e-2)

    # 3) Remainder-tile path: M not divisible by the tile (exercises cdiv grid).
    M2 = 40
    sf2 = jax.random.normal(jax.random.PRNGKey(1), (N, n_planes, M2, C), jnp.float32)
    rd2 = jnp.zeros((N, M2, 3), jnp.float32)
    out2 = osg_decoder_forward(sf2, rd2, params, tile_m=16)
    jax.block_until_ready(out2)
    ref2 = reference_forward(sf2, params)
    assert jnp.allclose(out2["rgb"], ref2["rgb"], atol=5e-2, rtol=5e-2)
    assert jnp.allclose(out2["sigma"], ref2["sigma"], atol=5e-2, rtol=5e-2)

    print("KERNEL_OK")
</pallas_src>

<mosaic_0001>
module attributes {stable_mosaic.version = 11 : i64} {
  func.func @_osg_decoder_kernel(%arg0: i32, %arg1: i32, %arg2: memref<1x3x64x32xf32, #tpu.memory_space<vmem>>, %arg3: memref<32x64xf32, #tpu.memory_space<vmem>>, %arg4: memref<1x64xf32, #tpu.memory_space<vmem>>, %arg5: memref<64x4xf32, #tpu.memory_space<vmem>>, %arg6: memref<1x4xf32, #tpu.memory_space<vmem>>, %arg7: memref<1x64x4xf32, #tpu.memory_space<vmem>>) attributes {dimension_semantics = [#tpu.dimension_semantics<parallel>, #tpu.dimension_semantics<parallel>], iteration_bounds = array<i64: 2, 1>, scalar_prefetch = 0 : i64, scratch_operands = 0 : i64, tpu.core_type = #tpu.core_type<tc>, window_params = [{transform_indices = @transform_0, window_bounds = array<i64: 1, 3, 64, 32>}, {pipeline_mode = #tpu.pipeline_mode<synchronous>, transform_indices = @transform_1, window_bounds = array<i64: 32, 64>}, {pipeline_mode = #tpu.pipeline_mode<synchronous>, transform_indices = @transform_2, window_bounds = array<i64: 1, 64>}, {pipeline_mode = #tpu.pipeline_mode<synchronous>, transform_indices = @transform_3, window_bounds = array<i64: 64, 4>}, {pipeline_mode = #tpu.pipeline_mode<synchronous>, transform_indices = @transform_4, window_bounds = array<i64: 1, 4>}, {transform_indices = @transform_5, window_bounds = array<i64: 1, 64, 4>}]} {
    %c0 = arith.constant 0 : index
    %c0_0 = arith.constant 0 : index
    %0 = vector.load %arg3[%c0, %c0_0] : memref<32x64xf32, #tpu.memory_space<vmem>>, vector<32x64xf32>
    %c0_1 = arith.constant 0 : index
    %c0_2 = arith.constant 0 : index
    %c0_3 = arith.constant 0 : index
    %c0_4 = arith.constant 0 : index
    %1 = vector.load %arg2[%c0_1, %c0_2, %c0_3, %c0_4] : memref<1x3x64x32xf32, #tpu.memory_space<vmem>>, vector<1x1x64x32xf32>
    %2 = vector.shape_cast %1 : vector<1x1x64x32xf32> to vector<64x32xf32>
    %cst = arith.constant dense<0.000000e+00> : vector<64x64xf32>
    %3 = tpu.matmul %2, %0, %cst {dimension_numbers = #tpu.dot_dimension_numbers<[1], [0], [0], [1], [0, 0, 1, 1], [], []>} : vector<64x32xf32>, vector<32x64xf32>, vector<64x64xf32> -> vector<64x64xf32>
    %c0_5 = arith.constant 0 : index
    %c1 = arith.constant 1 : index
    %c0_6 = arith.constant 0 : index
    %c0_7 = arith.constant 0 : index
    %4 = vector.load %arg2[%c0_5, %c1, %c0_6, %c0_7] : memref<1x3x64x32xf32, #tpu.memory_space<vmem>>, vector<1x1x64x32xf32>
    %5 = vector.shape_cast %4 : vector<1x1x64x32xf32> to vector<64x32xf32>
    %cst_8 = arith.constant dense<0.000000e+00> : vector<64x64xf32>
    %6 = tpu.matmul %5, %0, %cst_8 {dimension_numbers = #tpu.dot_dimension_numbers<[1], [0], [0], [1], [0, 0, 1, 1], [], []>} : vector<64x32xf32>, vector<32x64xf32>, vector<64x64xf32> -> vector<64x64xf32>
    %7 = arith.addf %3, %6 : vector<64x64xf32>
    %c0_9 = arith.constant 0 : index
    %c2 = arith.constant 2 : index
    %c0_10 = arith.constant 0 : index
    %c0_11 = arith.constant 0 : index
    %8 = vector.load %arg2[%c0_9, %c2, %c0_10, %c0_11] : memref<1x3x64x32xf32, #tpu.memory_space<vmem>>, vector<1x1x64x32xf32>
    %9 = vector.shape_cast %8 : vector<1x1x64x32xf32> to vector<64x32xf32>
    %cst_12 = arith.constant dense<0.000000e+00> : vector<64x64xf32>
    %10 = tpu.matmul %9, %0, %cst_12 {dimension_numbers = #tpu.dot_dimension_numbers<[1], [0], [0], [1], [0, 0, 1, 1], [], []>} : vector<64x32xf32>, vector<32x64xf32>, vector<64x64xf32> -> vector<64x64xf32>
    %11 = arith.addf %7, %10 : vector<64x64xf32>
    %c0_13 = arith.constant 0 : index
    %c0_14 = arith.constant 0 : index
    %12 = vector.load %arg4[%c0_13, %c0_14] : memref<1x64xf32, #tpu.memory_space<vmem>>, vector<1x64xf32>
    %13 = vector.broadcast %12 : vector<1x64xf32> to vector<64x64xf32>
    %14 = arith.addf %11, %13 : vector<64x64xf32>
    %cst_15 = arith.constant 0.000000e+00 : f32
    %15 = vector.broadcast %cst_15 : f32 to vector<64x64xf32>
    %16 = arith.maximumf %14, %15 : vector<64x64xf32>
    %17 = vector.broadcast %cst_15 : f32 to vector<64x64xf32>
    %18 = arith.subf %14, %17 : vector<64x64xf32>
    %19 = arith.cmpf one, %18, %18 : vector<64x64xf32>
    %20 = vector.broadcast %cst_15 : f32 to vector<64x64xf32>
    %21 = arith.addf %14, %20 : vector<64x64xf32>
    %22 = math.absf %18 : vector<64x64xf32>
    %cst_16 = arith.constant 0.000000e+00 : f32
    %23 = vector.broadcast %cst_16 : f32 to vector<64x64xf32>
    %24 = arith.subf %23, %22 : vector<64x64xf32>
    %25 = math.exp %24 : vector<64x64xf32>
    %26 = math.log1p %25 : vector<64x64xf32>
    %27 = arith.addf %16, %26 : vector<64x64xf32>
    %28 = arith.select %19, %21, %27 : vector<64x64xi1>, vector<64x64xf32>
    %c0_17 = arith.constant 0 : index
    %c0_18 = arith.constant 0 : index
    %29 = vector.load %arg5[%c0_17, %c0_18] : memref<64x4xf32, #tpu.memory_space<vmem>>, vector<64x4xf32>
    %cst_19 = arith.constant dense<0.000000e+00> : vector<64x4xf32>
    %30 = tpu.matmul %28, %29, %cst_19 {dimension_numbers = #tpu.dot_dimension_numbers<[1], [0], [0], [1], [0, 0, 1, 1], [], []>} : vector<64x64xf32>, vector<64x4xf32>, vector<64x4xf32> -> vector<64x4xf32>
    %c0_20 = arith.constant 0 : index
    %c0_21 = arith.constant 0 : index
    %31 = vector.load %arg6[%c0_20, %c0_21] : memref<1x4xf32, #tpu.memory_space<vmem>>, vector<1x4xf32>
    %32 = vector.broadcast %31 : vector<1x4xf32> to vector<64x4xf32>
    %33 = arith.addf %30, %32 : vector<64x4xf32>
    %34 = tpu.iota {dimensions = array<i32: 1>} : vector<64x4xi32>
    %35 = arith.negf %33 : vector<64x4xf32>
    %36 = math.exp %35 : vector<64x4xf32>
    %cst_22 = arith.constant 1.000000e+00 : f32
    %37 = vector.broadcast %cst_22 : f32 to vector<64x4xf32>
    %38 = arith.addf %37, %36 : vector<64x4xf32>
    %39 = arith.divf %37, %38 : vector<64x4xf32>
    %cst_23 = arith.constant 1.002000e+00 : f32
    %40 = vector.broadcast %cst_23 : f32 to vector<64x4xf32>
    %41 = arith.mulf %39, %40 : vector<64x4xf32>
    %cst_24 = arith.constant 1.000000e-03 : f32
    %42 = vector.broadcast %cst_24 : f32 to vector<64x4xf32>
    %43 = arith.subf %41, %42 : vector<64x4xf32>
    %c0_i32 = arith.constant 0 : i32
    %44 = vector.broadcast %c0_i32 : i32 to vector<64x4xi32>
    %45 = arith.cmpi eq, %34, %44 : vector<64x4xi32>
    %46 = arith.select %45, %33, %43 : vector<64x4xi1>, vector<64x4xf32>
    %c0_25 = arith.constant 0 : index
    %c0_26 = arith.constant 0 : index
    %c0_27 = arith.constant 0 : index
    %47 = vector.load %arg7[%c0_25, %c0_26, %c0_27] : memref<1x64x4xf32, #tpu.memory_space<vmem>>, vector<1x64x4xf32>
    %48 = vector.shape_cast %47 : vector<1x64x4xf32> to vector<64x4xf32>
    %49 = vector.shape_cast %46 : vector<64x4xf32> to vector<1x64x4xf32>
    tpu.vector_store %arg7[%c0_25, %c0_26, %c0_27], %49 {strides = array<i32>} : memref<1x64x4xf32, #tpu.memory_space<vmem>>, vector<1x64x4xf32>,
    return
  }
  func.func @transform_0(%arg0: i32, %arg1: i32) -> (i32, i32, i32, i32) {
    %c0_i32 = arith.constant 0 : i32
    %c0_i32_0 = arith.constant 0 : i32
    %c0_i32_1 = arith.constant 0 : i32
    return %arg0, %c0_i32, %arg1, %c0_i32_0 : i32, i32, i32, i32
  }
  func.func @transform_1(%arg0: i32, %arg1: i32) -> (i32, i32) {
    %c0_i32 = arith.constant 0 : i32
    %c0_i32_0 = arith.constant 0 : i32
    %c0_i32_1 = arith.constant 0 : i32
    return %c0_i32, %c0_i32_0 : i32, i32
  }
  func.func @transform_2(%arg0: i32, %arg1: i32) -> (i32, i32) {
    %c0_i32 = arith.constant 0 : i32
    %c0_i32_0 = arith.constant 0 : i32
    %c0_i32_1 = arith.constant 0 : i32
    return %c0_i32, %c0_i32_0 : i32, i32
  }
  func.func @transform_3(%arg0: i32, %arg1: i32) -> (i32, i32) {
    %c0_i32 = arith.constant 0 : i32
    %c0_i32_0 = arith.constant 0 : i32
    %c0_i32_1 = arith.constant 0 : i32
    return %c0_i32, %c0_i32_0 : i32, i32
  }
  func.func @transform_4(%arg0: i32, %arg1: i32) -> (i32, i32) {
    %c0_i32 = arith.constant 0 : i32
    %c0_i32_0 = arith.constant 0 : i32
    %c0_i32_1 = arith.constant 0 : i32
    return %c0_i32, %c0_i32_0 : i32, i32
  }
  func.func @transform_5(%arg0: i32, %arg1: i32) -> (i32, i32, i32) {
    %c0_i32 = arith.constant 0 : i32
    %c0_i32_0 = arith.constant 0 : i32
    return %arg0, %arg1, %c0_i32 : i32, i32, i32
  }
}

</mosaic_0001>

<llo_original>
// kernel: tpu_custom_call.1
$region0: #{tpu_custom_call.1}
  #allocation0 [shape = 'u32[]', space=smem, size = 0x4, offset = 0x4, fixed_abs, tag = 'smem constant byte address 0x4 - core index']
  #allocation1 [shape = 'u32[72,128]{1,0:T(1,128)}', space=vmem, size = 0x9000, scoped, tag = 'internal scratch']
  %s0 = inlined_call_operand.vmem [shape: f32[2,3,64,32], index: 0, kind: input, shape index: {}]
  %s1 = inlined_call_operand.vmem [shape: f32[32,64], index: 1, kind: input, shape index: {}]
  %s2 = inlined_call_operand.vmem [shape: f32[1,64], index: 2, kind: input, shape index: {}]
  %s3 = inlined_call_operand.vmem [shape: f32[64,4], index: 3, kind: input, shape index: {}]
  %s4 = inlined_call_operand.vmem [shape: f32[1,4], index: 4, kind: input, shape index: {}]
  %s5 = inlined_call_operand.vmem [shape: f32[2,64,4], index: 5, kind: output, shape index: {}]
  %s6 = sld [smem:[#allocation0]]
  $region53: #{tpu_custom_call.1} parent=0
    _
  %s8 = ssub.s32 1, %s6
  %s9 = scalar_select 0, %s8, %s6
  loop: start=0, step=1, limit=4
  $region2: #{tpu_custom_call.1} parent=0 // loop_pre_header
    _
  $region3: #{tpu_custom_call.1} parent=0 // loop_header
    %s11 = sphi 0, %s15
    %p12 = scmp.ge.s32.totalorder %s11, 4
    %s18 = sphi 0, %s30
    %s19 = sphi 0, %s26
    %s20 = sphi 0, %s18
    %s21 = sphi 0, %s19
    %s22 = sphi 0, %s20
    %s23 = sphi 0, %s21
    %s35 = sphi 0, %s37
    %s38 = sphi 0, %s35
    %s39 = sphi 0, %s38
    %s55 = sphi 0, %s39
    %s59 = sphi 0, %s59
    %s61 = sphi 0, %s59
    %s62 = sphi 0, %s61
    %s76 = sphi 0, %s62
    %s80 = sphi 0, %s80
    %s82 = sphi 0, %s80
    %s83 = sphi 0, %s82
    %s97 = sphi 0, %s83
    %s101 = sphi 0, %s101
    %s103 = sphi 0, %s101
    %s104 = sphi 0, %s103
    %s118 = sphi 0, %s104
    %s122 = sphi 0, %s122
    %s124 = sphi 0, %s122
    %s125 = sphi 0, %s124
    %s139 = sphi 0, %s125
    %s147 = sphi 0, %s149
    %s150 = sphi 0, %s147
    %s151 = sphi 0, %s150
    %s167 = sphi 0, %s151
  $region4: #{tpu_custom_call.1} parent=0 // loop_header_branch
    %14 = sbr.rel (%p12) target = $region8
  $region5: #{tpu_custom_call.1} parent=0 // loop_body
    %s16 = ssub.s32 %s11, 1
    %s17 = ssub.s32 %s11, 2
    %s24 = sadd.s32 1, %s19
    %p25 = scmp.ge.s32.totalorder %s24, 1
    %s26 = scalar_select %p25, 0, %s24
    %s27 = sadd.s32 1, %s18
    %s28 = scalar_select %p25, %s27, %s18
    %p29 = scmp.ge.s32.totalorder %s28, 2
    %s30 = scalar_select %p29, 0, %s28
    %s31 = ssub.s32 %s18, %s30
    %s32 = ssub.s32 %s19, %s26
    %s33 = sor.u32 %s31, %s32
    %p34 = scmp.eq.s32.totalorder %s33, 0
    %s36 = sadd.s32 %s35, 1
    %s37 = scalar_select %p34, %s35, %s36
    %p40 = pneg %p34
    %p41 = scmp.eq.s32.totalorder %s11, 1
    %p42 = por %p40, %p41
    %p43 = scmp.ne.s32.totalorder %s35, %s38
    %p44 = scmp.eq.s32.totalorder %s11, 0
    %p45 = por %p43, %p44
    %p46 = scmp.ne.s32.totalorder %s35, %s38
    %p47 = scmp.eq.s32.totalorder %s16, 1
    %p48 = por %p46, %p47
    %p49 = scmp.ne.s32.totalorder %s38, %s39
    %p50 = scmp.eq.s32.totalorder %s16, 0
    %p51 = por %p49, %p50
    %p52 = scmp.ne.s32.totalorder %s38, %s39
    %p53 = scmp.eq.s32.totalorder %s17, 1
    %p54 = por %p52, %p53
    %p56 = scmp.ne.s32.totalorder %s39, %s55
    %p57 = scmp.eq.s32.totalorder %s17, 0
    %p58 = por %p56, %p57
    %s60 = sadd.s32 %s59, 1
    %p63 = scmp.eq.s32.totalorder %s11, 1
    %p64 = scmp.ne.s32.totalorder %s59, %s61
    %p65 = scmp.eq.s32.totalorder %s11, 0
    %p66 = por %p64, %p65
    %p67 = scmp.ne.s32.totalorder %s59, %s61
    %p68 = scmp.eq.s32.totalorder %s16, 1
    %p69 = por %p67, %p68
    %p70 = scmp.ne.s32.totalorder %s61, %s62
    %p71 = scmp.eq.s32.totalorder %s16, 0
    %p72 = por %p70, %p71
    %p73 = scmp.ne.s32.totalorder %s61, %s62
    %p74 = scmp.eq.s32.totalorder %s17, 1
    %p75 = por %p73, %p74
    %p77 = scmp.ne.s32.totalorder %s62, %s76
    %p78 = scmp.eq.s32.totalorder %s17, 0
    %p79 = por %p77, %p78
    %s81 = sadd.s32 %s80, 1
    %p84 = scmp.eq.s32.totalorder %s11, 1
    %p85 = scmp.ne.s32.totalorder %s80, %s82
    %p86 = scmp.eq.s32.totalorder %s11, 0
    %p87 = por %p85, %p86
    %p88 = scmp.ne.s32.totalorder %s80, %s82
    %p89 = scmp.eq.s32.totalorder %s16, 1
    %p90 = por %p88, %p89
    %p91 = scmp.ne.s32.totalorder %s82, %s83
    %p92 = scmp.eq.s32.totalorder %s16, 0
    %p93 = por %p91, %p92
    %p94 = scmp.ne.s32.totalorder %s82, %s83
    %p95 = scmp.eq.s32.totalorder %s17, 1
    %p96 = por %p94, %p95
    %p98 = scmp.ne.s32.totalorder %s83, %s97
    %p99 = scmp.eq.s32.totalorder %s17, 0
    %p100 = por %p98, %p99
    %s102 = sadd.s32 %s101, 1
    %p105 = scmp.eq.s32.totalorder %s11, 1
    %p106 = scmp.ne.s32.totalorder %s101, %s103
    %p107 = scmp.eq.s32.totalorder %s11, 0
    %p108 = por %p106, %p107
    %p109 = scmp.ne.s32.totalorder %s101, %s103
    %p110 = scmp.eq.s32.totalorder %s16, 1
    %p111 = por %p109, %p110
    %p112 = scmp.ne.s32.totalorder %s103, %s104
    %p113 = scmp.eq.s32.totalorder %s16, 0
    %p114 = por %p112, %p113
    %p115 = scmp.ne.s32.totalorder %s103, %s104
    %p116 = scmp.eq.s32.totalorder %s17, 1
    %p117 = por %p115, %p116
    %p119 = scmp.ne.s32.totalorder %s104, %s118
    %p120 = scmp.eq.s32.totalorder %s17, 0
    %p121 = por %p119, %p120
    %s123 = sadd.s32 %s122, 1
    %p126 = scmp.eq.s32.totalorder %s11, 1
    %p127 = scmp.ne.s32.totalorder %s122, %s124
    %p128 = scmp.eq.s32.totalorder %s11, 0
    %p129 = por %p127, %p128
    %p130 = scmp.ne.s32.totalorder %s122, %s124
    %p131 = scmp.eq.s32.totalorder %s16, 1
    %p132 = por %p130, %p131
    %p133 = scmp.ne.s32.totalorder %s124, %s125
    %p134 = scmp.eq.s32.totalorder %s16, 0
    %p135 = por %p133, %p134
    %p136 = scmp.ne.s32.totalorder %s124, %s125
    %p137 = scmp.eq.s32.totalorder %s17, 1
    %p138 = por %p136, %p137
    %p140 = scmp.ne.s32.totalorder %s125, %s139
    %p141 = scmp.eq.s32.totalorder %s17, 0
    %p142 = por %p140, %p141
    %s143 = ssub.s32 %s18, %s30
    %s144 = ssub.s32 %s19, %s26
    %s145 = sor.u32 %s143, %s144
    %p146 = scmp.eq.s32.totalorder %s145, 0
    %s148 = sadd.s32 %s147, 1
    %s149 = scalar_select %p146, %s147, %s148
    %p152 = pneg %p146
    %p153 = scmp.eq.s32.totalorder %s11, 1
    %p154 = por %p152, %p153
    %p155 = scmp.ne.s32.totalorder %s147, %s150
    %p156 = scmp.eq.s32.totalorder %s11, 0
    %p157 = por %p155, %p156
    %p158 = scmp.ne.s32.totalorder %s147, %s150
    %p159 = scmp.eq.s32.totalorder %s16, 1
    %p160 = por %p158, %p159
    %p161 = scmp.ne.s32.totalorder %s150, %s151
    %p162 = scmp.eq.s32.totalorder %s16, 0
    %p163 = por %p161, %p162
    %p164 = scmp.ne.s32.totalorder %s150, %s151
    %p165 = scmp.eq.s32.totalorder %s17, 1
    %p166 = por %p164, %p165
    %p168 = scmp.ne.s32.totalorder %s151, %s167
    %p169 = scmp.eq.s32.totalorder %s17, 0
    %p170 = por %p168, %p169
    %p171 = scmp.le.s32.totalorder 1, %s11
    %p172 = scmp.lt.s32.totalorder %s11, 3
    %p173 = pnand %p171, %p172
    %p174 = pneg %p173
    // Predicated region
    $region9: #{tpu_custom_call.1} parent=5 // pred_check
      _
    $region10: #{tpu_custom_call.1} parent=5 // pred_check_branch
      %176 = sbr.rel (%p173) target = $region12
    $region11: #{tpu_custom_call.1} parent=5 // pred_region
      %s177 = ssub.s32 %s11, 1
      // Predicated region
      $region13: #{tpu_custom_call.1} parent=11 // pred_check
        %p178 = pneg %p72
      $region14: #{tpu_custom_call.1} parent=11 // pred_check_branch
        %180 = sbr.rel (%p178) target = $region16
      $region15: #{tpu_custom_call.1} parent=11 // pred_region
        _
      $region16: #{tpu_custom_call.1} parent=11 // pred_fallthru
        _
      // Predicated region
      $region17: #{tpu_custom_call.1} parent=11 // pred_check
        %p181 = pneg %p93
      $region18: #{tpu_custom_call.1} parent=11 // pred_check_branch
        %183 = sbr.rel (%p181) target = $region20
      $region19: #{tpu_custom_call.1} parent=11 // pred_region
        _
      $region20: #{tpu_custom_call.1} parent=11 // pred_fallthru
        _
      // Predicated region
      $region21: #{tpu_custom_call.1} parent=11 // pred_check
        %p184 = pneg %p114
      $region22: #{tpu_custom_call.1} parent=11 // pred_check_branch
        %186 = sbr.rel (%p184) target = $region24
      $region23: #{tpu_custom_call.1} parent=11 // pred_region
        _
      $region24: #{tpu_custom_call.1} parent=11 // pred_fallthru
        _
      // Predicated region
      $region25: #{tpu_custom_call.1} parent=11 // pred_check
        %p187 = pneg %p135
      $region26: #{tpu_custom_call.1} parent=11 // pred_check_branch
        %189 = sbr.rel (%p187) target = $region28
      $region27: #{tpu_custom_call.1} parent=11 // pred_region
        _
      $region28: #{tpu_custom_call.1} parent=11 // pred_fallthru
        _
    $region12: #{tpu_custom_call.1} parent=5 // pred_fallthru
      _
    %p190 = scmp.lt.s32.totalorder %s11, 2
    // Predicated region
    $region29: #{tpu_custom_call.1} parent=5 // pred_check
      %p191 = pneg %p190
    $region30: #{tpu_custom_call.1} parent=5 // pred_check_branch
      %193 = sbr.rel (%p191) target = $region32
    $region31: #{tpu_custom_call.1} parent=5 // pred_region
      // Predicated region
      $region33: #{tpu_custom_call.1} parent=31 // pred_check
        %p194 = pneg %p45
      $region34: #{tpu_custom_call.1} parent=31 // pred_check_branch
        %196 = sbr.rel (%p194) target = $region36
      $region35: #{tpu_custom_call.1} parent=31 // pred_region
        %s197 = smul.u32 8, %s19
        %p198 = scmp.lt.s32.totalorder %s18, 1
        %s199 = scalar_select %p198, %s18, 1
        %p200 = scmp.lt.s32.totalorder %s197, 7
        %s201 = scalar_select %p200, %s197, 7
        %s202 = smul.addr %s199, 24
        %s203 = sadd.s32 %s201, %s202
        %s204 = smul.addr %s203, 8
        %s205 = scalar_lea.vmem %s0, %s204
        %s206 = smul.u32 8, %s19
      $region36: #{tpu_custom_call.1} parent=31 // pred_fallthru
        _
    $region32: #{tpu_custom_call.1} parent=5 // pred_fallthru
      _
    %p207 = scmp.le.s32.totalorder 1, %s11
    %p208 = scmp.lt.s32.totalorder %s11, 3
    %p209 = pnand %p207, %p208
    %p210 = pneg %p209
    // Predicated region
    $region37: #{tpu_custom_call.1} parent=5 // pred_check
      _
    $region38: #{tpu_custom_call.1} parent=5 // pred_check_branch
      %212 = sbr.rel (%p209) target = $region40
    $region39: #{tpu_custom_call.1} parent=5 // pred_region
      %s213 = ssub.s32 %s11, 1
      %s214 = smul.u32 8, %s21
      %p215 = scmp.lt.s32.totalorder %s20, 1
      %s216 = scalar_select %p215, %s20, 1
      %p217 = scmp.lt.s32.totalorder %s214, 7
      %s218 = scalar_select %p217, %s214, 7
      %s219 = smul.addr %s216, 24
      %s220 = sadd.s32 %s218, %s219
      %s221 = smul.addr %s220, 8
      %s222 = scalar_lea.vmem %s0, %s221
      %p223 = pneg %p51
      %p224 = pneg %p48
      %p225 = pneg %p72
      %p226 = pneg %p69
      %p227 = pneg %p93
      %p228 = pneg %p90
      %p229 = pneg %p114
      %p230 = pneg %p111
      %p231 = pneg %p135
      %p232 = pneg %p132
      %p233 = pneg %p163
      %p234 = pneg %p160
      %s235 = smul.u32 8, %s21
      %p236 = scmp.lt.s32.totalorder %s20, 1
      %s237 = scalar_select %p236, %s20, 1
      %p238 = scmp.lt.s32.totalorder %s235, 7
      %s239 = scalar_select %p238, %s235, 7
      %s240 = smul.addr %s237, 8
      %s241 = sadd.s32 %s239, %s240
      %s242 = smul.addr %s241, 8
      %s243 = scalar_lea.vmem %s5, %s242
      %s244 = smul.u32 8, %s21
      %p245 = scmp.lt.s32.totalorder %s20, 1
      %s246 = scalar_select %p245, %s20, 1
      %p247 = scmp.lt.s32.totalorder %s244, 7
      %s248 = scalar_select %p247, %s244, 7
      %s249 = smul.addr %s246, 24
      %s250 = sadd.s32 %s248, %s249
      %s251 = smul.addr %s250, 8
      %s252 = scalar_lea.vmem %s0, %s251
      %s253 = smul.u32 8, %s21
      %s254 = smul.u32 8, %s21
      %p255 = scmp.lt.s32.totalorder %s20, 1
      %s256 = scalar_select %p255, %s20, 1
      %p257 = scmp.lt.s32.totalorder %s254, 7
      %s258 = scalar_select %p257, %s254, 7
      %s259 = smul.addr %s256, 8
      %s260 = sadd.s32 %s258, %s259
      %s261 = smul.addr %s260, 8
      %s262 = scalar_lea.vmem %s5, %s261
      %s263 = smul.u32 8, %s21
      %v264 = vld [vmem:[%s1] sm:$0xff]
      %v265 = vld [vmem:[%s1 + $0x8] sm:$0xff]
      %v266 = vld [vmem:[%s1 + $0x10] sm:$0xff]
      %v267 = vld [vmem:[%s1 + $0x18] sm:$0xff]
      %v268 = vld [vmem:[%s252] sm:$0xff]
      %v269 = vld [vmem:[%s252 + $0x8] sm:$0xff]
      %v270 = vld [vmem:[%s252 + $0x10] sm:$0xff]
      %v271 = vld [vmem:[%s252 + $0x18] sm:$0xff]
      %v272 = vld [vmem:[%s252 + $0x20] sm:$0xff]
      %v273 = vld [vmem:[%s252 + $0x28] sm:$0xff]
      %v274 = vld [vmem:[%s252 + $0x30] sm:$0xff]
      %v275 = vld [vmem:[%s252 + $0x38] sm:$0xff]
      %s276 = scalar_lea.vmem %s252, 64
      %v277 = vld [vmem:[%s276] sm:$0xff]
      %v278 = vld [vmem:[%s276 + $0x8] sm:$0xff]
      %v279 = vld [vmem:[%s276 + $0x10] sm:$0xff]
      %v280 = vld [vmem:[%s276 + $0x18] sm:$0xff]
      %v281 = vld [vmem:[%s276 + $0x20] sm:$0xff]
      %v282 = vld [vmem:[%s276 + $0x28] sm:$0xff]
      %v283 = vld [vmem:[%s276 + $0x30] sm:$0xff]
      %v284 = vld [vmem:[%s276 + $0x38] sm:$0xff]
      %vm285 = vcmask 261120
      %v287 = vsel %vm285, %v277, 0
      %v290 = vsel %vm285, %v278, 0
      %v293 = vsel %vm285, %v279, 0
      %v296 = vsel %vm285, %v280, 0
      %v299 = vsel %vm285, %v281, 0
      %v302 = vsel %vm285, %v282, 0
      %v305 = vsel %vm285, %v283, 0
      %v308 = vsel %vm285, %v284, 0
      %310 = vmatpush.msra.mxu0 0.0
      %311 = vmatpush.msra.mxu0 0.0
      %312 = vmatpush.msra.mxu0 0.0
      %313 = vmatpush.msra.mxu0 0.0
      %314 = vmatpush.msra.mxu0 0.0
      %315 = vmatpush.msra.mxu0 0.0
      %316 = vmatpush.msra.mxu0 0.0
      %317 = vmatpush.msra.mxu0 0.0
      %318 = vmatpush.msra.mxu0 0.0
      %319 = vmatpush.msra.mxu0 0.0
      %320 = vmatpush.msra.mxu0 0.0
      %321 = vmatpush.msra.mxu0 0.0
      %322 = vmatpush.msra.mxu0 %v267
      %323 = vmatpush.msra.mxu0 %v266
      %324 = vmatpush.msra.mxu0 %v265
      %325 = vmatpush.msra.mxu0 %v264
      %326 = vmatmul.f32.gmra.mxu0 %v287
      %v327 = vpop.f32.mrf.mxu0
      %v328 = vadd.f32 0.0, %v327
      %329 = vmatmul.f32.gmra.mxu0 %v290
      %v330 = vpop.f32.mrf.mxu0
      %v331 = vadd.f32 0.0, %v330
      %332 = vmatmul.f32.gmra.mxu0 %v293
      %v333 = vpop.f32.mrf.mxu0
      %v334 = vadd.f32 0.0, %v333
      %335 = vmatmul.f32.gmra.mxu0 %v296
      %v336 = vpop.f32.mrf.mxu0
      %v337 = vadd.f32 0.0, %v336
      %338 = vmatmul.f32.gmra.mxu0 %v299
      %v339 = vpop.f32.mrf.mxu0
      %v340 = vadd.f32 0.0, %v339
      %341 = vmatmul.f32.gmra.mxu0 %v302
      %v342 = vpop.f32.mrf.mxu0
      %v343 = vadd.f32 0.0, %v342
      %344 = vmatmul.f32.gmra.mxu0 %v305
      %v345 = vpop.f32.mrf.mxu0
      %v346 = vadd.f32 0.0, %v345
      %347 = vmatmul.f32.gmra.mxu0 %v308
      %v348 = vpop.f32.mrf.mxu0
      %v349 = vadd.f32 0.0, %v348
      %350 = vdwg.mxu0
      %v352 = vsel %vm285, %v268, 0
      %v355 = vsel %vm285, %v269, 0
      %v358 = vsel %vm285, %v270, 0
      %v361 = vsel %vm285, %v271, 0
      %v364 = vsel %vm285, %v272, 0
      %v367 = vsel %vm285, %v273, 0
      %v370 = vsel %vm285, %v274, 0
      %v373 = vsel %vm285, %v275, 0
      %375 = vmatpush.msra.mxu0 0.0
      %376 = vmatpush.msra.mxu0 0.0
      %377 = vmatpush.msra.mxu0 0.0
      %378 = vmatpush.msra.mxu0 0.0
      %379 = vmatpush.msra.mxu0 0.0
      %380 = vmatpush.msra.mxu0 0.0
      %381 = vmatpush.msra.mxu0 0.0
      %382 = vmatpush.msra.mxu0 0.0
      %383 = vmatpush.msra.mxu0 0.0
      %384 = vmatpush.msra.mxu0 0.0
      %385 = vmatpush.msra.mxu0 0.0
      %386 = vmatpush.msra.mxu0 0.0
      %387 = vmatpush.msra.mxu0 %v267
      %388 = vmatpush.msra.mxu0 %v266
      %389 = vmatpush.msra.mxu0 %v265
      %390 = vmatpush.msra.mxu0 %v264
      %391 = vmatmul.f32.gmra.mxu0 %v352
      %v392 = vpop.f32.mrf.mxu0
      %v393 = vadd.f32 %v328, %v392
      %394 = vmatmul.f32.gmra.mxu0 %v355
      %v395 = vpop.f32.mrf.mxu0
      %v396 = vadd.f32 %v331, %v395
      %397 = vmatmul.f32.gmra.mxu0 %v358
      %v398 = vpop.f32.mrf.mxu0
      %v399 = vadd.f32 %v334, %v398
      %400 = vmatmul.f32.gmra.mxu0 %v361
      %v401 = vpop.f32.mrf.mxu0
      %v402 = vadd.f32 %v337, %v401
      %403 = vmatmul.f32.gmra.mxu0 %v364
      %v404 = vpop.f32.mrf.mxu0
      %v405 = vadd.f32 %v340, %v404
      %406 = vmatmul.f32.gmra.mxu0 %v367
      %v407 = vpop.f32.mrf.mxu0
      %v408 = vadd.f32 %v343, %v407
      %409 = vmatmul.f32.gmra.mxu0 %v370
      %v410 = vpop.f32.mrf.mxu0
      %v411 = vadd.f32 %v346, %v410
      %412 = vmatmul.f32.gmra.mxu0 %v373
      %v413 = vpop.f32.mrf.mxu0
      %v414 = vadd.f32 %v349, %v413
      %415 = vdwg.mxu0
      %s416 = scalar_lea.vmem %s252, 128
      %v417 = vld [vmem:[%s416] sm:$0xff]
      %v418 = vld [vmem:[%s416 + $0x8] sm:$0xff]
      %v419 = vld [vmem:[%s416 + $0x10] sm:$0xff]
      %v420 = vld [vmem:[%s416 + $0x18] sm:$0xff]
      %v421 = vld [vmem:[%s416 + $0x20] sm:$0xff]
      %v422 = vld [vmem:[%s416 + $0x28] sm:$0xff]
      %v423 = vld [vmem:[%s416 + $0x30] sm:$0xff]
      %v424 = vld [vmem:[%s416 + $0x38] sm:$0xff]
      %v426 = vsel %vm285, %v417, 0
      %v429 = vsel %vm285, %v418, 0
      %v432 = vsel %vm285, %v419, 0
      %v435 = vsel %vm285, %v420, 0
      %v438 = vsel %vm285, %v421, 0
      %v441 = vsel %vm285, %v422, 0
      %v444 = vsel %vm285, %v423, 0
      %v447 = vsel %vm285, %v424, 0
      %449 = vmatpush.msra.mxu0 0.0
      %450 = vmatpush.msra.mxu0 0.0
      %451 = vmatpush.msra.mxu0 0.0
      %452 = vmatpush.msra.mxu0 0.0
      %453 = vmatpush.msra.mxu0 0.0
      %454 = vmatpush.msra.mxu0 0.0
      %455 = vmatpush.msra.mxu0 0.0
      %456 = vmatpush.msra.mxu0 0.0
      %457 = vmatpush.msra.mxu0 0.0
      %458 = vmatpush.msra.mxu0 0.0
      %459 = vmatpush.msra.mxu0 0.0
      %460 = vmatpush.msra.mxu0 0.0
      %461 = vmatpush.msra.mxu0 %v267
      %462 = vmatpush.msra.mxu0 %v266
      %463 = vmatpush.msra.mxu0 %v265
      %464 = vmatpush.msra.mxu0 %v264
      %465 = vmatmul.f32.gmra.mxu0 %v426
      %v466 = vpop.f32.mrf.mxu0
      %v467 = vadd.f32 0.0, %v466
      %468 = vmatmul.f32.gmra.mxu0 %v429
      %v469 = vpop.f32.mrf.mxu0
      %v470 = vadd.f32 0.0, %v469
      %471 = vmatmul.f32.gmra.mxu0 %v432
      %v472 = vpop.f32.mrf.mxu0
      %v473 = vadd.f32 0.0, %v472
      %474 = vmatmul.f32.gmra.mxu0 %v435
      %v475 = vpop.f32.mrf.mxu0
      %v476 = vadd.f32 0.0, %v475
      %477 = vmatmul.f32.gmra.mxu0 %v438
      %v478 = vpop.f32.mrf.mxu0
      %v479 = vadd.f32 0.0, %v478
      %480 = vmatmul.f32.gmra.mxu0 %v441
      %v481 = vpop.f32.mrf.mxu0
      %v482 = vadd.f32 0.0, %v481
      %483 = vmatmul.f32.gmra.mxu0 %v444
      %v484 = vpop.f32.mrf.mxu0
      %v485 = vadd.f32 0.0, %v484
      %486 = vmatmul.f32.gmra.mxu0 %v447
      %v487 = vpop.f32.mrf.mxu0
      %v488 = vadd.f32 0.0, %v487
      %489 = vdwg.mxu0
      %v490 = vadd.f32 %v393, %v467
      %v491 = vadd.f32 %v396, %v470
      %v492 = vadd.f32 %v399, %v473
      %v493 = vadd.f32 %v402, %v476
      %v494 = vadd.f32 %v405, %v479
      %v495 = vadd.f32 %v408, %v482
      %v496 = vadd.f32 %v411, %v485
      %v497 = vadd.f32 %v414, %v488
      %v498 = vld [vmem:[%s2] sm:$0x1]
      %v500 = vperm.slane %v498, 0
      %v502 = vadd.f32 %v490, %v500
      %v503 = vadd.f32 %v491, %v500
      %v504 = vadd.f32 %v492, %v500
      %v505 = vadd.f32 %v493, %v500
      %v506 = vadd.f32 %v494, %v500
      %v507 = vadd.f32 %v495, %v500
      %v508 = vadd.f32 %v496, %v500
      %v509 = vadd.f32 %v497, %v500
      %v510 = vmax.f32 %v502, 0.0
      %v511 = vmax.f32 %v503, 0.0
      %v512 = vmax.f32 %v504, 0.0
      %v513 = vmax.f32 %v505, 0.0
      %v514 = vmax.f32 %v506, 0.0
      %v515 = vmax.f32 %v507, 0.0
      %v516 = vmax.f32 %v508, 0.0
      %v517 = vmax.f32 %v509, 0.0
      %vm518 = vcmp.ne.f32.partialorder %v502, %v502
      %vm519 = vcmp.ne.f32.partialorder %v503, %v503
      %vm520 = vcmp.ne.f32.partialorder %v504, %v504
      %vm521 = vcmp.ne.f32.partialorder %v505, %v505
      %vm522 = vcmp.ne.f32.partialorder %v506, %v506
      %vm523 = vcmp.ne.f32.partialorder %v507, %v507
      %vm524 = vcmp.ne.f32.partialorder %v508, %v508
      %vm525 = vcmp.ne.f32.partialorder %v509, %v509
      %v526 = vadd.f32 %v502, 0.0
      %v527 = vadd.f32 %v503, 0.0
      %v528 = vadd.f32 %v504, 0.0
      %v529 = vadd.f32 %v505, 0.0
      %v530 = vadd.f32 %v506, 0.0
      %v531 = vadd.f32 %v507, 0.0
      %v532 = vadd.f32 %v508, 0.0
      %v533 = vadd.f32 %v509, 0.0
      %v534 = vand.u32 2147483647, %v502
      %v535 = vand.u32 2147483647, %v503
      %v536 = vand.u32 2147483647, %v504
      %v537 = vand.u32 2147483647, %v505
      %v538 = vand.u32 2147483647, %v506
      %v539 = vand.u32 2147483647, %v507
      %v540 = vand.u32 2147483647, %v508
      %v541 = vand.u32 2147483647, %v509
      %v542 = vsub.f32 0.0, %v534
      %v543 = vsub.f32 0.0, %v535
      %v544 = vsub.f32 0.0, %v536
      %v545 = vsub.f32 0.0, %v537
      %v546 = vsub.f32 0.0, %v538
      %v547 = vsub.f32 0.0, %v539
      %v548 = vsub.f32 0.0, %v540
      %v549 = vsub.f32 0.0, %v541
      %v550 = vmul.f32 %v542, 1.442695
      %v551 = vpow.pop %v550
      %v552 = vmul.f32 %v543, 1.442695
      %v553 = vpow.pop %v552
      %v554 = vmul.f32 %v544, 1.442695
      %v555 = vpow.pop %v554
      %v556 = vmul.f32 %v545, 1.442695
      %v557 = vpow.pop %v556
      %v558 = vmul.f32 %v546, 1.442695
      %v559 = vpow.pop %v558
      %v560 = vmul.f32 %v547, 1.442695
      %v561 = vpow.pop %v560
      %v562 = vmul.f32 %v548, 1.442695
      %v563 = vpow.pop %v562
      %v564 = vmul.f32 %v549, 1.442695
      %v565 = vpow.pop %v564
      %v566 = vadd.f32 %v551, 1.0
      %v567 = vlog2.pop %v566
      %v568 = vmul.f32 %v567, 0.6931472
      %v569 = vmul.f32 -0.5, %v551
      %v570 = vadd.f32 %v569, 1.0
      %v571 = vmul.f32 %v570, %v551
      %v572 = vand.u32 2147483647, %v551
      %vm573 = vcmp.lt.f32.partialorder %v572, 0.0004427343
      %v574 = vsel %vm573, %v571, %v568
      %v575 = vadd.f32 %v553, 1.0
      %v576 = vlog2.pop %v575
      %v577 = vmul.f32 %v576, 0.6931472
      %v578 = vmul.f32 -0.5, %v553
      %v579 = vadd.f32 %v578, 1.0
      %v580 = vmul.f32 %v579, %v553
      %v581 = vand.u32 2147483647, %v553
      %vm582 = vcmp.lt.f32.partialorder %v581, 0.0004427343
      %v583 = vsel %vm582, %v580, %v577
      %v584 = vadd.f32 %v555, 1.0
      %v585 = vlog2.pop %v584
      %v586 = vmul.f32 %v585, 0.6931472
      %v587 = vmul.f32 -0.5, %v555
      %v588 = vadd.f32 %v587, 1.0
      %v589 = vmul.f32 %v588, %v555
      %v590 = vand.u32 2147483647, %v555
      %vm591 = vcmp.lt.f32.partialorder %v590, 0.0004427343
      %v592 = vsel %vm591, %v589, %v586
      %v593 = vadd.f32 %v557, 1.0
      %v594 = vlog2.pop %v593
      %v595 = vmul.f32 %v594, 0.6931472
      %v596 = vmul.f32 -0.5, %v557
      %v597 = vadd.f32 %v596, 1.0
      %v598 = vmul.f32 %v597, %v557
      %v599 = vand.u32 2147483647, %v557
      %vm600 = vcmp.lt.f32.partialorder %v599, 0.0004427343
      %v601 = vsel %vm600, %v598, %v595
      %v602 = vadd.f32 %v559, 1.0
      %v603 = vlog2.pop %v602
      %v604 = vmul.f32 %v603, 0.6931472
      %v605 = vmul.f32 -0.5, %v559
      %v606 = vadd.f32 %v605, 1.0
      %v607 = vmul.f32 %v606, %v559
      %v608 = vand.u32 2147483647, %v559
      %vm609 = vcmp.lt.f32.partialorder %v608, 0.0004427343
      %v610 = vsel %vm609, %v607, %v604
      %v611 = vadd.f32 %v561, 1.0
      %v612 = vlog2.pop %v611
      %v613 = vmul.f32 %v612, 0.6931472
      %v614 = vmul.f32 -0.5, %v561
      %v615 = vadd.f32 %v614, 1.0
      %v616 = vmul.f32 %v615, %v561
      %v617 = vand.u32 2147483647, %v561
      %vm618 = vcmp.lt.f32.partialorder %v617, 0.0004427343
      %v619 = vsel %vm618, %v616, %v613
      %v620 = vadd.f32 %v563, 1.0
      %v621 = vlog2.pop %v620
      %v622 = vmul.f32 %v621, 0.6931472
      %v623 = vmul.f32 -0.5, %v563
      %v624 = vadd.f32 %v623, 1.0
      %v625 = vmul.f32 %v624, %v563
      %v626 = vand.u32 2147483647, %v563
      %vm627 = vcmp.lt.f32.partialorder %v626, 0.0004427343
      %v628 = vsel %vm627, %v625, %v622
      %v629 = vadd.f32 %v565, 1.0
      %v630 = vlog2.pop %v629
      %v631 = vmul.f32 %v630, 0.6931472
      %v632 = vmul.f32 -0.5, %v565
      %v633 = vadd.f32 %v632, 1.0
      %v634 = vmul.f32 %v633, %v565
      %v635 = vand.u32 2147483647, %v565
      %vm636 = vcmp.lt.f32.partialorder %v635, 0.0004427343
      %v637 = vsel %vm636, %v634, %v631
      %v638 = vadd.f32 %v510, %v574
      %v639 = vadd.f32 %v511, %v583
      %v640 = vadd.f32 %v512, %v592
      %v641 = vadd.f32 %v513, %v601
      %v642 = vadd.f32 %v514, %v610
      %v643 = vadd.f32 %v515, %v619
      %v644 = vadd.f32 %v516, %v628
      %v645 = vadd.f32 %v517, %v637
      %v646 = vsel %vm518, %v526, %v638
      %v647 = vsel %vm519, %v527, %v639
      %v648 = vsel %vm520, %v528, %v640
      %v649 = vsel %vm521, %v529, %v641
      %v650 = vsel %vm522, %v530, %v642
      %v651 = vsel %vm523, %v531, %v643
      %v652 = vsel %vm524, %v532, %v644
      %v653 = vsel %vm525, %v533, %v645
      %v654 = vld [vmem:[%s3] sm:$0xff]
      %v655 = vld [vmem:[%s3 + $0x8] sm:$0xff]
      %v656 = vld [vmem:[%s3 + $0x10] sm:$0xff]
      %v657 = vld [vmem:[%s3 + $0x18] sm:$0xff]
      %v658 = vld [vmem:[%s3 + $0x20] sm:$0xff]
      %v659 = vld [vmem:[%s3 + $0x28] sm:$0xff]
      %v660 = vld [vmem:[%s3 + $0x30] sm:$0xff]
      %v661 = vld [vmem:[%s3 + $0x38] sm:$0xff]
      %v662 = vld [vmem:[%s4] sm:$0x1]
      %v664 = vperm.slane %v662, 0
      %vm666 = vcmask 523264
      %v668 = vsel %vm666, %v646, 0
      %v671 = vsel %vm666, %v647, 0
      %v674 = vsel %vm666, %v648, 0
      %v677 = vsel %vm666, %v649, 0
      %v680 = vsel %vm666, %v650, 0
      %v683 = vsel %vm666, %v651, 0
      %v686 = vsel %vm666, %v652, 0
      %v689 = vsel %vm666, %v653, 0
      %691 = vmatpush.msra.mxu0 0.0
      %692 = vmatpush.msra.mxu0 0.0
      %693 = vmatpush.msra.mxu0 0.0
      %694 = vmatpush.msra.mxu0 0.0
      %695 = vmatpush.msra.mxu0 0.0
      %696 = vmatpush.msra.mxu0 0.0
      %697 = vmatpush.msra.mxu0 0.0
      %698 = vmatpush.msra.mxu0 0.0
      %699 = vmatpush.msra.mxu0 %v661
      %700 = vmatpush.msra.mxu0 %v660
      %701 = vmatpush.msra.mxu0 %v659
      %702 = vmatpush.msra.mxu0 %v658
      %703 = vmatpush.msra.mxu0 %v657
      %704 = vmatpush.msra.mxu0 %v656
      %705 = vmatpush.msra.mxu0 %v655
      %706 = vmatpush.msra.mxu0 %v654
      %707 = vmatmul.f32.gmra.mxu0 %v668
      %v708 = vpop.f32.mrf.mxu0
      %v709 = vadd.f32 %v664, %v708
      %710 = vmatmul.f32.gmra.mxu0 %v671
      %v711 = vpop.f32.mrf.mxu0
      %v712 = vadd.f32 %v664, %v711
      %713 = vmatmul.f32.gmra.mxu0 %v674
      %v714 = vpop.f32.mrf.mxu0
      %v715 = vadd.f32 %v664, %v714
      %716 = vmatmul.f32.gmra.mxu0 %v677
      %v717 = vpop.f32.mrf.mxu0
      %v718 = vadd.f32 %v664, %v717
      %719 = vmatmul.f32.gmra.mxu0 %v680
      %v720 = vpop.f32.mrf.mxu0
      %v721 = vadd.f32 %v664, %v720
      %722 = vmatmul.f32.gmra.mxu0 %v683
      %v723 = vpop.f32.mrf.mxu0
      %v724 = vadd.f32 %v664, %v723
      %725 = vmatmul.f32.gmra.mxu0 %v686
      %v726 = vpop.f32.mrf.mxu0
      %v727 = vadd.f32 %v664, %v726
      %728 = vmatmul.f32.gmra.mxu0 %v689
      %v729 = vpop.f32.mrf.mxu0
      %v730 = vadd.f32 %v664, %v729
      %731 = vdwg.mxu0
      %v732 = vlaneseq
      %v733 = vand.u32 %v732, 127
      %v734 = vxor.u32 %v709, 2147483648
      %v735 = vxor.u32 %v712, 2147483648
      %v736 = vxor.u32 %v715, 2147483648
      %v737 = vxor.u32 %v718, 2147483648
      %v738 = vxor.u32 %v721, 2147483648
      %v739 = vxor.u32 %v724, 2147483648
      %v740 = vxor.u32 %v727, 2147483648
      %v741 = vxor.u32 %v730, 2147483648
      %v742 = vmul.f32 %v734, 1.442695
      %v743 = vpow.pop %v742
      %v744 = vmul.f32 %v735, 1.442695
      %v745 = vpow.pop %v744
      %v746 = vmul.f32 %v736, 1.442695
      %v747 = vpow.pop %v746
      %v748 = vmul.f32 %v737, 1.442695
      %v749 = vpow.pop %v748
      %v750 = vmul.f32 %v738, 1.442695
      %v751 = vpow.pop %v750
      %v752 = vmul.f32 %v739, 1.442695
      %v753 = vpow.pop %v752
      %v754 = vmul.f32 %v740, 1.442695
      %v755 = vpow.pop %v754
      %v756 = vmul.f32 %v741, 1.442695
      %v757 = vpow.pop %v756
      %v758 = vadd.f32 %v743, 1.0
      %v759 = vadd.f32 %v745, 1.0
      %v760 = vadd.f32 %v747, 1.0
      %v761 = vadd.f32 %v749, 1.0
      %v762 = vadd.f32 %v751, 1.0
      %v763 = vadd.f32 %v753, 1.0
      %v764 = vadd.f32 %v755, 1.0
      %v765 = vadd.f32 %v757, 1.0
      %v766 = vrcp.pop %v758
      %v767 = vmul.f32 %v758, %v766
      %v768 = vsub.f32 1.0, %v767
      %v769 = vmul.f32 %v766, %v768
      %v770 = vadd.f32 %v766, %v769
      %vm771 = vweird.f32 %v758
      %vm772 = vweird.f32 %v766
      %vm773 = vmor %vm771, %vm772
      %v774 = vsel %vm773, %v766, %v770
      %v775 = vand.u32 2147483647, %v758
      %vm776 = vcmp.eq.f32.partialorder %v775, 8.507059e+37
      %v777 = vand.u32 %v758, 2147483648
      %v778 = vor.u32 1.1754944e-38, %v777
      %v779 = vsel %vm776, %v778, %v774
      %v780 = vmul.f32 1.0, %v779
      %v781 = vrcp.pop %v759
      %v782 = vmul.f32 %v759, %v781
      %v783 = vsub.f32 1.0, %v782
      %v784 = vmul.f32 %v781, %v783
      %v785 = vadd.f32 %v781, %v784
      %vm786 = vweird.f32 %v759
      %vm787 = vweird.f32 %v781
      %vm788 = vmor %vm786, %vm787
      %v789 = vsel %vm788, %v781, %v785
      %v790 = vand.u32 2147483647, %v759
      %vm791 = vcmp.eq.f32.partialorder %v790, 8.507059e+37
      %v792 = vand.u32 %v759, 2147483648
      %v793 = vor.u32 1.1754944e-38, %v792
      %v794 = vsel %vm791, %v793, %v789
      %v795 = vmul.f32 1.0, %v794
      %v796 = vrcp.pop %v760
      %v797 = vmul.f32 %v760, %v796
      %v798 = vsub.f32 1.0, %v797
      %v799 = vmul.f32 %v796, %v798
      %v800 = vadd.f32 %v796, %v799
      %vm801 = vweird.f32 %v760
      %vm802 = vweird.f32 %v796
      %vm803 = vmor %vm801, %vm802
      %v804 = vsel %vm803, %v796, %v800
      %v805 = vand.u32 2147483647, %v760
      %vm806 = vcmp.eq.f32.partialorder %v805, 8.507059e+37
      %v807 = vand.u32 %v760, 2147483648
      %v808 = vor.u32 1.1754944e-38, %v807
      %v809 = vsel %vm806, %v808, %v804
      %v810 = vmul.f32 1.0, %v809
      %v811 = vrcp.pop %v761
      %v812 = vmul.f32 %v761, %v811
      %v813 = vsub.f32 1.0, %v812
      %v814 = vmul.f32 %v811, %v813
      %v815 = vadd.f32 %v811, %v814
      %vm816 = vweird.f32 %v761
      %vm817 = vweird.f32 %v811
      %vm818 = vmor %vm816, %vm817
      %v819 = vsel %vm818, %v811, %v815
      %v820 = vand.u32 2147483647, %v761
      %vm821 = vcmp.eq.f32.partialorder %v820, 8.507059e+37
      %v822 = vand.u32 %v761, 2147483648
      %v823 = vor.u32 1.1754944e-38, %v822
      %v824 = vsel %vm821, %v823, %v819
      %v825 = vmul.f32 1.0, %v824
      %v826 = vrcp.pop %v762
      %v827 = vmul.f32 %v762, %v826
      %v828 = vsub.f32 1.0, %v827
      %v829 = vmul.f32 %v826, %v828
      %v830 = vadd.f32 %v826, %v829
      %vm831 = vweird.f32 %v762
      %vm832 = vweird.f32 %v826
      %vm833 = vmor %vm831, %vm832
      %v834 = vsel %vm833, %v826, %v830
      %v835 = vand.u32 2147483647, %v762
      %vm836 = vcmp.eq.f32.partialorder %v835, 8.507059e+37
      %v837 = vand.u32 %v762, 2147483648
      %v838 = vor.u32 1.1754944e-38, %v837
      %v839 = vsel %vm836, %v838, %v834
      %v840 = vmul.f32 1.0, %v839
      %v841 = vrcp.pop %v763
      %v842 = vmul.f32 %v763, %v841
      %v843 = vsub.f32 1.0, %v842
      %v844 = vmul.f32 %v841, %v843
      %v845 = vadd.f32 %v841, %v844
      %vm846 = vweird.f32 %v763
      %vm847 = vweird.f32 %v841
      %vm848 = vmor %vm846, %vm847
      %v849 = vsel %vm848, %v841, %v845
      %v850 = vand.u32 2147483647, %v763
      %vm851 = vcmp.eq.f32.partialorder %v850, 8.507059e+37
      %v852 = vand.u32 %v763, 2147483648
      %v853 = vor.u32 1.1754944e-38, %v852
      %v854 = vsel %vm851, %v853, %v849
      %v855 = vmul.f32 1.0, %v854
      %v856 = vrcp.pop %v764
      %v857 = vmul.f32 %v764, %v856
      %v858 = vsub.f32 1.0, %v857
      %v859 = vmul.f32 %v856, %v858
      %v860 = vadd.f32 %v856, %v859
      %vm861 = vweird.f32 %v764
      %vm862 = vweird.f32 %v856
      %vm863 = vmor %vm861, %vm862
      %v864 = vsel %vm863, %v856, %v860
      %v865 = vand.u32 2147483647, %v764
      %vm866 = vcmp.eq.f32.partialorder %v865, 8.507059e+37
      %v867 = vand.u32 %v764, 2147483648
      %v868 = vor.u32 1.1754944e-38, %v867
      %v869 = vsel %vm866, %v868, %v864
      %v870 = vmul.f32 1.0, %v869
      %v871 = vrcp.pop %v765
      %v872 = vmul.f32 %v765, %v871
      %v873 = vsub.f32 1.0, %v872
      %v874 = vmul.f32 %v871, %v873
      %v875 = vadd.f32 %v871, %v874
      %vm876 = vweird.f32 %v765
      %vm877 = vweird.f32 %v871
      %vm878 = vmor %vm876, %vm877
      %v879 = vsel %vm878, %v871, %v875
      %v880 = vand.u32 2147483647, %v765
      %vm881 = vcmp.eq.f32.partialorder %v880, 8.507059e+37
      %v882 = vand.u32 %v765, 2147483648
      %v883 = vor.u32 1.1754944e-38, %v882
      %v884 = vsel %vm881, %v883, %v879
      %v885 = vmul.f32 1.0, %v884
      %v886 = vmul.f32 %v780, 1.002
      %v887 = vmul.f32 %v795, 1.002
      %v888 = vmul.f32 %v810, 1.002
      %v889 = vmul.f32 %v825, 1.002
      %v890 = vmul.f32 %v840, 1.002
      %v891 = vmul.f32 %v855, 1.002
      %v892 = vmul.f32 %v870, 1.002
      %v893 = vmul.f32 %v885, 1.002
      %v894 = vsub.f32 %v886, 0.001
      %v895 = vsub.f32 %v887, 0.001
      %v896 = vsub.f32 %v888, 0.001
      %v897 = vsub.f32 %v889, 0.001
      %v898 = vsub.f32 %v890, 0.001
      %v899 = vsub.f32 %v891, 0.001
      %v900 = vsub.f32 %v892, 0.001
      %v901 = vsub.f32 %v893, 0.001
      %vm902 = vcmp.eq.s32.totalorder %v733, 0
      %v903 = vsel %vm902, %v709, %v894
      %v904 = vsel %vm902, %v712, %v895
      %v905 = vsel %vm902, %v715, %v896
      %v906 = vsel %vm902, %v718, %v897
      %v907 = vsel %vm902, %v721, %v898
      %v908 = vsel %vm902, %v724, %v899
      %v909 = vsel %vm902, %v727, %v900
      %v910 = vsel %vm902, %v730, %v901
      %vm911 = vcmask 31744
      %912 = vst.msk [vmem:[%s262] sm:$0xff] %vm911, %v903
      %913 = vst.msk [vmem:[%s262 + $0x8] sm:$0xff] %vm911, %v904
      %914 = vst.msk [vmem:[%s262 + $0x10] sm:$0xff] %vm911, %v905
      %915 = vst.msk [vmem:[%s262 + $0x18] sm:$0xff] %vm911, %v906
      %916 = vst.msk [vmem:[%s262 + $0x20] sm:$0xff] %vm911, %v907
      %917 = vst.msk [vmem:[%s262 + $0x28] sm:$0xff] %vm911, %v908
      %918 = vst.msk [vmem:[%s262 + $0x30] sm:$0xff] %vm911, %v909
      %919 = vst.msk [vmem:[%s262 + $0x38] sm:$0xff] %vm911, %v910
      %s920 = smul.u32 8, %s21
      %p921 = scmp.lt.s32.totalorder %s20, 1
      %s922 = scalar_select %p921, %s20, 1
      %p923 = scmp.lt.s32.totalorder %s920, 7
      %s924 = scalar_select %p923, %s920, 7
      %s925 = smul.addr %s922, 8
      %s926 = sadd.s32 %s924, %s925
      %s927 = smul.addr %s926, 8
      %s928 = scalar_lea.vmem %s5, %s927
      // Predicated region
      $region41: #{tpu_custom_call.1} parent=39 // pred_check
        %p929 = pneg %p160
      $region42: #{tpu_custom_call.1} parent=39 // pred_check_branch
        %931 = sbr.rel (%p929) target = $region44
      $region43: #{tpu_custom_call.1} parent=39 // pred_region
        %s932 = smul.u32 8, %s21
      $region44: #{tpu_custom_call.1} parent=39 // pred_fallthru
        _
    $region40: #{tpu_custom_call.1} parent=5 // pred_fallthru
      _
    %p933 = scmp.le.s32.totalorder 2, %s11
    // Predicated region
    $region45: #{tpu_custom_call.1} parent=5 // pred_check
      %p934 = pneg %p933
    $region46: #{tpu_custom_call.1} parent=5 // pred_check_branch
      %936 = sbr.rel (%p934) target = $region48
    $region47: #{tpu_custom_call.1} parent=5 // pred_region
      %s937 = ssub.s32 %s11, 2
      // Predicated region
      $region49: #{tpu_custom_call.1} parent=47 // pred_check
        %p938 = pneg %p166
      $region50: #{tpu_custom_call.1} parent=47 // pred_check_branch
        %940 = sbr.rel (%p938) target = $region52
      $region51: #{tpu_custom_call.1} parent=47 // pred_region
        %s941 = smul.u32 8, %s23
        %p942 = scmp.lt.s32.totalorder %s22, 1
        %s943 = scalar_select %p942, %s22, 1
        %p944 = scmp.lt.s32.totalorder %s941, 7
        %s945 = scalar_select %p944, %s941, 7
        %s946 = smul.addr %s943, 8
        %s947 = sadd.s32 %s945, %s946
        %s948 = smul.addr %s947, 8
        %s949 = scalar_lea.vmem %s5, %s948
      $region52: #{tpu_custom_call.1} parent=47 // pred_fallthru
        _
    $region48: #{tpu_custom_call.1} parent=5 // pred_fallthru
      _
  $region6: #{tpu_custom_call.1} parent=0 // loop_footer
    %s15 = sadd.s32 1, %s11
  $region7: #{tpu_custom_call.1} parent=0 // loop_footer_branch
    %10 = sbr.rel target = $region3
  $region8: #{tpu_custom_call.1} parent=0 // loop_exit
    _

</llo_original>
